<compile_context>
chip_gen: v5e
topology: v5e:2x2
jax: 0.10.0
libtpu: 0.0.40
codegen_flags: <defaults>
</compile_context>

<pallas_src>
import jax
import jax.numpy as jnp
from jax.experimental import pallas as pl
from jax.experimental.pallas import tpu as pltpu


# ---------------------------------------------------------------------------
# helpers
# ---------------------------------------------------------------------------
def _round_up(x, m):
    return (x + m - 1) // m * m


def _is_bf16(dtype):
    return jnp.dtype(dtype) == jnp.dtype(jnp.bfloat16)


def _itemsize(dtype):
    return jnp.dtype(dtype).itemsize


def _const_block_spec(block_shape):
    """Constant-index BlockSpec; single-buffered (the block never changes)."""
    zeros = (0,) * len(block_shape)
    index_map = lambda *_grid_idx: zeros
    try:
        return pl.BlockSpec(block_shape, index_map,
                            pipeline_mode=pl.Buffered(1))
    except (TypeError, AttributeError):
        # Fallback for Pallas versions without pipeline_mode / Buffered.
        return pl.BlockSpec(block_shape, index_map)


def _batch_tile_cap(per_row_bytes, fixed_bytes, sub,
                    budget=32 * 1024 * 1024, hard_cap=512):
    """Largest sublane-aligned batch tile whose working set fits `budget`."""
    avail = max(budget - fixed_bytes, sub * per_row_bytes)
    cap = min(hard_cap, avail // max(per_row_bytes, 1))
    return max(sub, cap // sub * sub)


def _pick_batch_tile(batch, sub, cap):
    """Batch tile with bounded padding waste; split single tiles for megacore."""
    cap = max(sub, cap // sub * sub)
    n_tiles = -(-batch // cap)
    tb = min(cap, _round_up(-(-batch // n_tiles), sub))
    b_pad = _round_up(batch, tb)
    # v7x has 2 TensorCores: with a single batch tile the second core idles.
    # Split in two when it costs no extra padding.
    if b_pad // tb == 1 and tb >= 2 * sub and (tb // 2) % sub == 0:
        tb //= 2
        b_pad = _round_up(batch, tb)
    return tb, b_pad


# ---------------------------------------------------------------------------
# kernels
# ---------------------------------------------------------------------------
def _decoder_kernel_resident(z_ref, w1_ref, b1_ref, w2_ref, b2_ref, out_ref):
    # x_tilda = ReLU(z @ w1 + b1) @ w2 + b2, f32 accumulation throughout.
    h = jnp.dot(z_ref[...], w1_ref[...], preferred_element_type=jnp.float32)
    h = jnp.maximum(h + b1_ref[...], 0.0)                  # bias + ReLU in f32
    y = jnp.dot(h.astype(w2_ref.dtype), w2_ref[...],
                preferred_element_type=jnp.float32)
    out_ref[...] = (y + b2_ref[...]).astype(out_ref.dtype)


def _decoder_kernel_ntiled(z_ref, w1_ref, b1_ref, w2_ref, b2_ref, out_ref,
                           h_ref):
    # grid = (batch tiles i, output-feature tiles j); j is the inner
    # ("arbitrary", sequential) axis, so the per-batch-tile hidden scratch is
    # valid to reuse across all j.
    j = pl.program_id(1)

    @pl.when(j == 0)
    def _():
        h = jnp.dot(z_ref[...], w1_ref[...],
                    preferred_element_type=jnp.float32)
        h_ref[...] = jnp.maximum(h + b1_ref[...], 0.0).astype(h_ref.dtype)

    y = jnp.dot(h_ref[...], w2_ref[...], preferred_element_type=jnp.float32)
    out_ref[...] = (y + b2_ref[...]).astype(out_ref.dtype)


# ---------------------------------------------------------------------------
# wrapper
# ---------------------------------------------------------------------------
def prepare_decoder_params(w1, b1, w2, b2, *, compute_dtype=None,
                           resident_weight_budget=20 * 1024 * 1024):
    """Pad / cast the decoder weights once (reuse across decoder_apply calls).

    Zero padding of the contraction / feature axes is exact for this MLP
    (ReLU(0) = 0, padded w2 rows are 0).
    """
    compute_dtype = jnp.dtype(w1.dtype if compute_dtype is None
                              else compute_dtype)
    dim_z, latent_dim = w1.shape
    x_dim = w2.shape[1]
    itm = _itemsize(compute_dtype)

    k_pad = _round_up(dim_z, 128)
    l_pad = _round_up(latent_dim, 128)
    n128 = _round_up(x_dim, 128)

    w_bytes = (k_pad * l_pad + l_pad * n128) * itm
    resident = w_bytes <= resident_weight_budget
    # Resident path: no N tiling, so only 128-alignment is needed.
    # Streaming path: pad n to a multiple of 512 so N tiles are full 512-wide
    # unmasked slabs (fewer grid steps, fewer DMA descriptors).
    n_pad = n128 if resident else _round_up(x_dim, 512)

    w1p = jnp.pad(w1, ((0, k_pad - dim_z),
                       (0, l_pad - latent_dim))).astype(compute_dtype)
    w2p = jnp.pad(w2, ((0, l_pad - latent_dim),
                       (0, n_pad - x_dim))).astype(compute_dtype)
    b1p = jnp.pad(jnp.asarray(b1, jnp.float32).reshape(1, -1),
                  ((0, 0), (0, l_pad - latent_dim)))
    b2p = jnp.pad(jnp.asarray(b2, jnp.float32).reshape(1, -1),
                  ((0, 0), (0, n_pad - x_dim)))

    return {
        "w1": w1p, "b1": b1p, "w2": w2p, "b2": b2p,
        "dim_z": dim_z, "latent_dim": latent_dim, "x_dim": x_dim,
        "k_pad": k_pad, "l_pad": l_pad, "n_pad": n_pad,
        "compute_dtype": compute_dtype, "resident": resident,
    }


def decoder_apply(params, z, *, out_dtype=None, vmem_limit_bytes=None):
    """Pallas decoder forward: x_tilda = ReLU(z @ w1 + b1) @ w2 + b2."""
    batch, dim_z = z.shape
    if dim_z != params["dim_z"]:
        raise ValueError(f"z feature dim {dim_z} != dim_z {params['dim_z']}")

    compute_dtype = params["compute_dtype"]
    out_dtype = jnp.dtype(z.dtype if out_dtype is None else out_dtype)
    k_pad, l_pad, n_pad = params["k_pad"], params["l_pad"], params["n_pad"]
    x_dim = params["x_dim"]
    itm_c, itm_o = _itemsize(compute_dtype), _itemsize(out_dtype)

    # Sublane alignment must satisfy the narrowest tiled dtype (z and out).
    sub = 16 if (_is_bf16(compute_dtype) or _is_bf16(out_dtype)) else 8

    w1p, b1p, w2p, b2p = params["w1"], params["b1"], params["w2"], params["b2"]

    if params["resident"]:
        # All weights VMEM-resident (single-buffered); batch-only grid.
        fixed = ((k_pad * l_pad + l_pad * n_pad) * itm_c
                 + (l_pad + n_pad) * 4)
        per_row = (2 * k_pad * itm_c + 2 * n_pad * itm_o   # z / out (2-buf)
                   + (l_pad + n_pad) * 4)                  # f32 intermediates
        cap = _batch_tile_cap(per_row, fixed, sub, hard_cap=512)
        tb, b_pad = _pick_batch_tile(batch, sub, cap)
        est = fixed + tb * per_row
        vmem_limit = int(vmem_limit_bytes if vmem_limit_bytes is not None
                         else min(2 * est + (4 << 20), 100 << 20))

        zp = jnp.pad(z, ((0, b_pad - batch),
                         (0, k_pad - dim_z))).astype(compute_dtype)

        out_padded = pl.pallas_call(
            _decoder_kernel_resident,
            out_shape=jax.ShapeDtypeStruct((b_pad, n_pad), out_dtype),
            grid=(b_pad // tb,),
            in_specs=[
                pl.BlockSpec((tb, k_pad), lambda i: (i, 0)),   # z: batch tile
                _const_block_spec((k_pad, l_pad)),             # w1: resident
                _const_block_spec((1, l_pad)),                 # b1: resident
                _const_block_spec((l_pad, n_pad)),             # w2: resident
                _const_block_spec((1, n_pad)),                 # b2: resident
            ],
            out_specs=pl.BlockSpec((tb, n_pad), lambda i: (i, 0)),
            compiler_params=pltpu.CompilerParams(
                dimension_semantics=("parallel",),
                vmem_limit_bytes=vmem_limit,
            ),
        )(zp, w1p, b1p, w2p, b2p)
    else:
        # w2 too large for VMEM: stream it in 512-wide N tiles; reuse the
        # hidden activations across N tiles via a per-batch-tile scratch.
        tn = 512                      # n_pad is a multiple of 512 on this path
        fixed = (k_pad * l_pad * itm_c + l_pad * 4           # resident w1/b1
                 + 2 * (l_pad * tn * itm_c + tn * 4))        # streamed w2/b2
        per_row = (2 * k_pad * itm_c + 2 * tn * itm_o
                   + l_pad * itm_c                            # h scratch
                   + (l_pad + tn) * 4)                        # f32 intermediates
        cap = _batch_tile_cap(per_row, fixed, sub, hard_cap=256)
        tb, b_pad = _pick_batch_tile(batch, sub, cap)
        est = fixed + tb * per_row
        vmem_limit = int(vmem_limit_bytes if vmem_limit_bytes is not None
                         else min(2 * est + (4 << 20), 100 << 20))

        zp = jnp.pad(z, ((0, b_pad - batch),
                         (0, k_pad - dim_z))).astype(compute_dtype)

        out_padded = pl.pallas_call(
            _decoder_kernel_ntiled,
            out_shape=jax.ShapeDtypeStruct((b_pad, n_pad), out_dtype),
            grid=(b_pad // tb, n_pad // tn),
            in_specs=[
                pl.BlockSpec((tb, k_pad), lambda i, j: (i, 0)),  # z
                _const_block_spec((k_pad, l_pad)),               # w1: resident
                _const_block_spec((1, l_pad)),                   # b1: resident
                pl.BlockSpec((l_pad, tn), lambda i, j: (0, j)),  # w2: N tile
                pl.BlockSpec((1, tn), lambda i, j: (0, j)),      # b2: N tile
            ],
            out_specs=pl.BlockSpec((tb, tn), lambda i, j: (i, j)),
            scratch_shapes=[pltpu.VMEM((tb, l_pad), compute_dtype)],
            compiler_params=pltpu.CompilerParams(
                dimension_semantics=("parallel", "arbitrary"),
                vmem_limit_bytes=vmem_limit,
            ),
        )(zp, w1p, b1p, w2p, b2p)

    return out_padded[:batch, :x_dim]


def decoder_forward(z, w1, b1, w2, b2, *, compute_dtype=None, out_dtype=None,
                    vmem_limit_bytes=None):
    """One-shot convenience wrapper.  For repeated calls, use
    prepare_decoder_params once + decoder_apply per call (avoids re-padding
    the weights on every call)."""
    params = prepare_decoder_params(w1, b1, w2, b2,
                                    compute_dtype=compute_dtype)
    return decoder_apply(params, z, out_dtype=out_dtype,
                         vmem_limit_bytes=vmem_limit_bytes)


def init_decoder_params(key, dim_z, latent_dim, x_dim, dtype=jnp.float32):
    """Deterministic synthetic parameter init (PyTorch Linear-like scale)."""
    k1, k2, k3, k4 = jax.random.split(key, 4)
    s1 = 1.0 / jnp.sqrt(dim_z)
    s2 = 1.0 / jnp.sqrt(latent_dim)
    w1 = jax.random.uniform(k1, (dim_z, latent_dim), dtype, -s1, s1)
    b1 = jax.random.uniform(k2, (1, latent_dim), dtype, -s1, s1)
    w2 = jax.random.uniform(k3, (latent_dim, x_dim), dtype, -s2, s2)
    b2 = jax.random.uniform(k4, (1, x_dim), dtype, -s2, s2)
    return w1, b1, w2, b2


if __name__ == "__main__":
    key = jax.random.PRNGKey(0)
    k_z, k_z2, k_p = jax.random.split(key, 3)

    batch, dim_z, latent_dim, x_dim = 8, 8, 32, 64
    z = jax.random.normal(k_z, (batch, dim_z), jnp.float32)
    w1, b1, w2, b2 = init_decoder_params(k_p, dim_z, latent_dim, x_dim)
    ref = jnp.maximum(z @ w1 + b1, 0.0) @ w2 + b2

    # 1) Resident-weight fast path; weights padded/cast once.
    params = prepare_decoder_params(w1, b1, w2, b2)
    y = decoder_apply(params, z)
    jax.block_until_ready(y)
    assert y.shape == (batch, x_dim)
    assert jnp.allclose(y, ref, atol=1e-5, rtol=1e-5)

    # 2) Reuse the same prepared params for a different batch size
    #    (no weight re-padding per call).
    batch2 = 24
    z2 = jax.random.normal(k_z2, (batch2, dim_z), jnp.float32)
    ref2 = jnp.maximum(z2 @ w1 + b1, 0.0) @ w2 + b2
    y2 = decoder_apply(params, z2)
    jax.block_until_ready(y2)
    assert y2.shape == (batch2, x_dim)
    assert jnp.allclose(y2, ref2, atol=1e-5, rtol=1e-5)

    # 3) N-tiled streaming path (forced by pretending w2 doesn't fit VMEM);
    #    exercises the hidden-scratch reuse kernel.
    params_tiled = prepare_decoder_params(w1, b1, w2, b2,
                                          resident_weight_budget=0)
    y3 = decoder_apply(params_tiled, z)
    jax.block_until_ready(y3)
    assert y3.shape == (batch, x_dim)
    assert jnp.allclose(y3, ref, atol=1e-5, rtol=1e-5)

    # 4) bf16 MXU path (bf16 operands, f32 accumulation, f32 output).
    params_bf16 = prepare_decoder_params(w1, b1, w2, b2,
                                         compute_dtype=jnp.bfloat16)
    y4 = decoder_apply(params_bf16, z, out_dtype=jnp.float32)
    jax.block_until_ready(y4)
    assert y4.shape == (batch, x_dim)
    assert jnp.allclose(y4, ref, atol=5e-2, rtol=5e-2)

    # 5) f32 compute with bf16 output (exercises the 16-row sublane alignment).
    y5 = decoder_apply(params, z, out_dtype=jnp.bfloat16)
    jax.block_until_ready(y5)
    assert y5.dtype == jnp.bfloat16 and y5.shape == (batch, x_dim)
    assert jnp.allclose(y5.astype(jnp.float32), ref, atol=2e-2, rtol=2e-2)

    print("KERNEL_OK")
</pallas_src>

<mosaic_0001>
module attributes {stable_mosaic.version = 11 : i64} {
  func.func @_decoder_kernel_resident(%arg0: i32, %arg1: memref<8x128xf32, #tpu.memory_space<vmem>>, %arg2: memref<128x128xf32, #tpu.memory_space<vmem>>, %arg3: memref<1x128xf32, #tpu.memory_space<vmem>>, %arg4: memref<128x128xf32, #tpu.memory_space<vmem>>, %arg5: memref<1x128xf32, #tpu.memory_space<vmem>>, %arg6: memref<8x128xf32, #tpu.memory_space<vmem>>) attributes {dimension_semantics = [#tpu.dimension_semantics<parallel>], iteration_bounds = array<i64: 1>, scalar_prefetch = 0 : i64, scratch_operands = 0 : i64, tpu.core_type = #tpu.core_type<tc>, window_params = [{transform_indices = @transform_0, window_bounds = array<i64: 8, 128>}, {pipeline_mode = #tpu.pipeline_mode<synchronous>, transform_indices = @transform_1, window_bounds = array<i64: 128, 128>}, {pipeline_mode = #tpu.pipeline_mode<synchronous>, transform_indices = @transform_2, window_bounds = array<i64: 1, 128>}, {pipeline_mode = #tpu.pipeline_mode<synchronous>, transform_indices = @transform_3, window_bounds = array<i64: 128, 128>}, {pipeline_mode = #tpu.pipeline_mode<synchronous>, transform_indices = @transform_4, window_bounds = array<i64: 1, 128>}, {transform_indices = @transform_5, window_bounds = array<i64: 8, 128>}]} {
    %c0 = arith.constant 0 : index
    %c0_0 = arith.constant 0 : index
    %0 = vector.load %arg1[%c0, %c0_0] : memref<8x128xf32, #tpu.memory_space<vmem>>, vector<8x128xf32>
    %c0_1 = arith.constant 0 : index
    %c0_2 = arith.constant 0 : index
    %1 = vector.load %arg2[%c0_1, %c0_2] : memref<128x128xf32, #tpu.memory_space<vmem>>, vector<128x128xf32>
    %cst = arith.constant dense<0.000000e+00> : vector<8x128xf32>
    %2 = tpu.matmul %0, %1, %cst {dimension_numbers = #tpu.dot_dimension_numbers<[1], [0], [0], [1], [0, 0, 1, 1], [], []>} : vector<8x128xf32>, vector<128x128xf32>, vector<8x128xf32> -> vector<8x128xf32>
    %c0_3 = arith.constant 0 : index
    %c0_4 = arith.constant 0 : index
    %3 = vector.load %arg3[%c0_3, %c0_4] : memref<1x128xf32, #tpu.memory_space<vmem>>, vector<1x128xf32>
    %4 = vector.broadcast %3 : vector<1x128xf32> to vector<8x128xf32>
    %5 = arith.addf %2, %4 : vector<8x128xf32>
    %cst_5 = arith.constant 0.000000e+00 : f32
    %6 = vector.broadcast %cst_5 : f32 to vector<8x128xf32>
    %7 = arith.maximumf %5, %6 : vector<8x128xf32>
    %c0_6 = arith.constant 0 : index
    %c0_7 = arith.constant 0 : index
    %8 = vector.load %arg4[%c0_6, %c0_7] : memref<128x128xf32, #tpu.memory_space<vmem>>, vector<128x128xf32>
    %cst_8 = arith.constant dense<0.000000e+00> : vector<8x128xf32>
    %9 = tpu.matmul %7, %8, %cst_8 {dimension_numbers = #tpu.dot_dimension_numbers<[1], [0], [0], [1], [0, 0, 1, 1], [], []>} : vector<8x128xf32>, vector<128x128xf32>, vector<8x128xf32> -> vector<8x128xf32>
    %c0_9 = arith.constant 0 : index
    %c0_10 = arith.constant 0 : index
    %10 = vector.load %arg5[%c0_9, %c0_10] : memref<1x128xf32, #tpu.memory_space<vmem>>, vector<1x128xf32>
    %11 = vector.broadcast %10 : vector<1x128xf32> to vector<8x128xf32>
    %12 = arith.addf %9, %11 : vector<8x128xf32>
    %c0_11 = arith.constant 0 : index
    %c0_12 = arith.constant 0 : index
    %13 = vector.load %arg6[%c0_11, %c0_12] : memref<8x128xf32, #tpu.memory_space<vmem>>, vector<8x128xf32>
    tpu.vector_store %arg6[%c0_11, %c0_12], %12 {strides = array<i32>} : memref<8x128xf32, #tpu.memory_space<vmem>>, vector<8x128xf32>,
    return
  }
  func.func @transform_0(%arg0: i32) -> (i32, i32) {
    %c0_i32 = arith.constant 0 : i32
    %c0_i32_0 = arith.constant 0 : i32
    return %arg0, %c0_i32 : i32, i32
  }
  func.func @transform_1(%arg0: i32) -> (i32, i32) {
    %c0_i32 = arith.constant 0 : i32
    %c0_i32_0 = arith.constant 0 : i32
    %c0_i32_1 = arith.constant 0 : i32
    return %c0_i32, %c0_i32_0 : i32, i32
  }
  func.func @transform_2(%arg0: i32) -> (i32, i32) {
    %c0_i32 = arith.constant 0 : i32
    %c0_i32_0 = arith.constant 0 : i32
    %c0_i32_1 = arith.constant 0 : i32
    return %c0_i32, %c0_i32_0 : i32, i32
  }
  func.func @transform_3(%arg0: i32) -> (i32, i32) {
    %c0_i32 = arith.constant 0 : i32
    %c0_i32_0 = arith.constant 0 : i32
    %c0_i32_1 = arith.constant 0 : i32
    return %c0_i32, %c0_i32_0 : i32, i32
  }
  func.func @transform_4(%arg0: i32) -> (i32, i32) {
    %c0_i32 = arith.constant 0 : i32
    %c0_i32_0 = arith.constant 0 : i32
    %c0_i32_1 = arith.constant 0 : i32
    return %c0_i32, %c0_i32_0 : i32, i32
  }
  func.func @transform_5(%arg0: i32) -> (i32, i32) {
    %c0_i32 = arith.constant 0 : i32
    %c0_i32_0 = arith.constant 0 : i32
    return %arg0, %c0_i32 : i32, i32
  }
}

</mosaic_0001>

<llo_original>
// kernel: tpu_custom_call.1
$region0: #{tpu_custom_call.1}
  #allocation0 [shape = 'u32[]', space=smem, size = 0x4, offset = 0x4, fixed_abs, tag = 'smem constant byte address 0x4 - core index']
  #allocation1 [shape = 'u32[72,128]{1,0:T(1,128)}', space=vmem, size = 0x9000, scoped, tag = 'internal scratch']
  %s0 = inlined_call_operand.hbm [shape: f32[8,128], index: 0, kind: input, shape index: {}]
  %s1 = inlined_call_operand.hbm [shape: f32[128,128], index: 1, kind: input, shape index: {}]
  %s2 = inlined_call_operand.vmem [shape: f32[1,128], index: 2, kind: input, shape index: {}]
  %s3 = inlined_call_operand.hbm [shape: f32[128,128], index: 3, kind: input, shape index: {}]
  %s4 = inlined_call_operand.vmem [shape: f32[1,128], index: 4, kind: input, shape index: {}]
  %s5 = inlined_call_operand.hbm [shape: f32[8,128], index: 5, kind: output, shape index: {}]
  %s6 = sld [smem:[#allocation0]]
  $region42: #{tpu_custom_call.1} parent=0
    _
  %s8 = ssub.s32 1, %s6
  %s9 = scalar_select 0, %s8, %s6
  $region1: #{tpu_custom_call.1} parent=0
    #allocation2 [shape = 'u8[4096]{0}', space=vmem, size = 0x1000, scoped, tag = 'input window, operand 0, single buffered']
    #allocation3 [shape = 's32[1]{0}', space=sflag, size = 0x4, scoped, tag = 'scoped memory for tpu_custom_call.1']
    #allocation4 [shape = 's32[1]{0}', space=sflag, size = 0x4, scoped, tag = 'scoped memory for tpu_custom_call.1']
    #allocation5 [shape = 'u8[65536]{0}', space=vmem, size = 0x10000, scoped, tag = 'input window, operand 1, single buffered']
    #allocation6 [shape = 's32[1]{0}', space=sflag, size = 0x4, scoped, tag = 'scoped memory for tpu_custom_call.1']
    #allocation7 [shape = 'u8[65536]{0}', space=vmem, size = 0x10000, scoped, tag = 'input window, operand 3, single buffered']
    #allocation8 [shape = 'u8[4096]{0}', space=vmem, size = 0x1000, scoped, tag = 'output window, operand 0, single buffered']
    %10 = vsyncpa [#allocation3], 0
    %11 = vsyncpa [#allocation6], 0
    %12 = vsyncpa [#allocation4], 0
    // Predicated region
    $region2: #{tpu_custom_call.1} parent=1 // pred_check
      _
    $region3: #{tpu_custom_call.1} parent=1 // pred_check_branch
      %14 = sbr.rel (0) target = $region5
    $region4: #{tpu_custom_call.1} parent=1 // pred_region
      %16 = vsyncadd [#allocation3], 0
      %s18 = sshll.u32 %s0, 4
      %s19 = int_to_ptr.hbm [resolvable:$true] %s18
      %s20 = sshll.u32 [#allocation2], 4
      %s21 = int_to_ptr.vmem [resolvable:$true] %s20
      %23 = dma.hbm_to_vmem [thread:$0]  %s19, 128, %s21, [#allocation3]
    $region5: #{tpu_custom_call.1} parent=1 // pred_fallthru
      _
    // Predicated region
    $region6: #{tpu_custom_call.1} parent=1 // pred_check
      _
    $region7: #{tpu_custom_call.1} parent=1 // pred_check_branch
      %25 = sbr.rel (0) target = $region9
    $region8: #{tpu_custom_call.1} parent=1 // pred_region
      %27 = vsyncadd [#allocation6], 0
      %s28 = sshll.u32 %s1, 4
      %s29 = int_to_ptr.hbm [resolvable:$true] %s28
      %s30 = sshll.u32 [#allocation5], 4
      %s31 = int_to_ptr.vmem [resolvable:$true] %s30
      %36 = dma.hbm_to_vmem [thread:$0]  %s29, 2048, %s31, [#allocation6], 128, 128, 8
    $region9: #{tpu_custom_call.1} parent=1 // pred_fallthru
      _
    // Predicated region
    $region10: #{tpu_custom_call.1} parent=1 // pred_check
      _
    $region11: #{tpu_custom_call.1} parent=1 // pred_check_branch
      %38 = sbr.rel (0) target = $region13
    $region12: #{tpu_custom_call.1} parent=1 // pred_region
      _
    $region13: #{tpu_custom_call.1} parent=1 // pred_fallthru
      _
    // Predicated region
    $region14: #{tpu_custom_call.1} parent=1 // pred_check
      _
    $region15: #{tpu_custom_call.1} parent=1 // pred_check_branch
      %40 = sbr.rel (0) target = $region17
    $region16: #{tpu_custom_call.1} parent=1 // pred_region
      %42 = vsyncadd [#allocation6], 0
      %s43 = sshll.u32 %s3, 4
      %s44 = int_to_ptr.hbm [resolvable:$true] %s43
      %s45 = sshll.u32 [#allocation7], 4
      %s46 = int_to_ptr.vmem [resolvable:$true] %s45
      %51 = dma.hbm_to_vmem [thread:$0]  %s44, 2048, %s46, [#allocation6], 128, 128, 8
    $region17: #{tpu_custom_call.1} parent=1 // pred_fallthru
      _
    // Predicated region
    $region18: #{tpu_custom_call.1} parent=1 // pred_check
      _
    $region19: #{tpu_custom_call.1} parent=1 // pred_check_branch
      %53 = sbr.rel (0) target = $region21
    $region20: #{tpu_custom_call.1} parent=1 // pred_region
      _
    $region21: #{tpu_custom_call.1} parent=1 // pred_fallthru
      _
    // Predicated region
    $region22: #{tpu_custom_call.1} parent=1 // pred_check
      _
    $region23: #{tpu_custom_call.1} parent=1 // pred_check_branch
      %55 = sbr.rel (0) target = $region25
    $region24: #{tpu_custom_call.1} parent=1 // pred_region
      %57 = dma.done [#allocation3], 128
    $region25: #{tpu_custom_call.1} parent=1 // pred_fallthru
      _
    // Predicated region
    $region26: #{tpu_custom_call.1} parent=1 // pred_check
      _
    $region27: #{tpu_custom_call.1} parent=1 // pred_check_branch
      %59 = sbr.rel (0) target = $region29
    $region28: #{tpu_custom_call.1} parent=1 // pred_region
      %61 = dma.done [#allocation6], 2048
    $region29: #{tpu_custom_call.1} parent=1 // pred_fallthru
      _
    // Predicated region
    $region30: #{tpu_custom_call.1} parent=1 // pred_check
      _
    $region31: #{tpu_custom_call.1} parent=1 // pred_check_branch
      %63 = sbr.rel (0) target = $region33
    $region32: #{tpu_custom_call.1} parent=1 // pred_region
      %65 = dma.done [#allocation6], 2048
    $region33: #{tpu_custom_call.1} parent=1 // pred_fallthru
      _
    %v66 = vld [vmem:[#allocation2] sm:$0xff]
    %v67 = vld [vmem:[#allocation5] sm:$0xff]
    %v68 = vld [vmem:[#allocation5 + $0x8] sm:$0xff]
    %v69 = vld [vmem:[#allocation5 + $0x10] sm:$0xff]
    %v70 = vld [vmem:[#allocation5 + $0x18] sm:$0xff]
    %v71 = vld [vmem:[#allocation5 + $0x20] sm:$0xff]
    %v72 = vld [vmem:[#allocation5 + $0x28] sm:$0xff]
    %v73 = vld [vmem:[#allocation5 + $0x30] sm:$0xff]
    %v74 = vld [vmem:[#allocation5 + $0x38] sm:$0xff]
    %v75 = vld [vmem:[#allocation5 + $0x40] sm:$0xff]
    %v76 = vld [vmem:[#allocation5 + $0x48] sm:$0xff]
    %v77 = vld [vmem:[#allocation5 + $0x50] sm:$0xff]
    %v78 = vld [vmem:[#allocation5 + $0x58] sm:$0xff]
    %v79 = vld [vmem:[#allocation5 + $0x60] sm:$0xff]
    %v80 = vld [vmem:[#allocation5 + $0x68] sm:$0xff]
    %v81 = vld [vmem:[#allocation5 + $0x70] sm:$0xff]
    %v82 = vld [vmem:[#allocation5 + $0x78] sm:$0xff]
    %v83 = vld [vmem:[%s2] sm:$0x1]
    %v85 = vperm.slane %v83, 0
    %87 = vmatpush.msra.mxu0 %v82
    %88 = vmatpush.msra.mxu0 %v81
    %89 = vmatpush.msra.mxu0 %v80
    %90 = vmatpush.msra.mxu0 %v79
    %91 = vmatpush.msra.mxu0 %v78
    %92 = vmatpush.msra.mxu0 %v77
    %93 = vmatpush.msra.mxu0 %v76
    %94 = vmatpush.msra.mxu0 %v75
    %95 = vmatpush.msra.mxu0 %v74
    %96 = vmatpush.msra.mxu0 %v73
    %97 = vmatpush.msra.mxu0 %v72
    %98 = vmatpush.msra.mxu0 %v71
    %99 = vmatpush.msra.mxu0 %v70
    %100 = vmatpush.msra.mxu0 %v69
    %101 = vmatpush.msra.mxu0 %v68
    %102 = vmatpush.msra.mxu0 %v67
    %103 = vmatmul.f32.gmra.mxu0 %v66
    %v104 = vpop.f32.mrf.mxu0
    %v105 = vadd.f32 %v85, %v104
    %106 = vdwg.mxu0
    %v107 = vmax.f32 %v105, 0.0
    %v108 = vld [vmem:[#allocation7] sm:$0xff]
    %v109 = vld [vmem:[#allocation7 + $0x8] sm:$0xff]
    %v110 = vld [vmem:[#allocation7 + $0x10] sm:$0xff]
    %v111 = vld [vmem:[#allocation7 + $0x18] sm:$0xff]
    %v112 = vld [vmem:[#allocation7 + $0x20] sm:$0xff]
    %v113 = vld [vmem:[#allocation7 + $0x28] sm:$0xff]
    %v114 = vld [vmem:[#allocation7 + $0x30] sm:$0xff]
    %v115 = vld [vmem:[#allocation7 + $0x38] sm:$0xff]
    %v116 = vld [vmem:[#allocation7 + $0x40] sm:$0xff]
    %v117 = vld [vmem:[#allocation7 + $0x48] sm:$0xff]
    %v118 = vld [vmem:[#allocation7 + $0x50] sm:$0xff]
    %v119 = vld [vmem:[#allocation7 + $0x58] sm:$0xff]
    %v120 = vld [vmem:[#allocation7 + $0x60] sm:$0xff]
    %v121 = vld [vmem:[#allocation7 + $0x68] sm:$0xff]
    %v122 = vld [vmem:[#allocation7 + $0x70] sm:$0xff]
    %v123 = vld [vmem:[#allocation7 + $0x78] sm:$0xff]
    %v124 = vld [vmem:[%s4] sm:$0x1]
    %v126 = vperm.slane %v124, 0
    %128 = vmatpush.msra.mxu0 %v123
    %129 = vmatpush.msra.mxu0 %v122
    %130 = vmatpush.msra.mxu0 %v121
    %131 = vmatpush.msra.mxu0 %v120
    %132 = vmatpush.msra.mxu0 %v119
    %133 = vmatpush.msra.mxu0 %v118
    %134 = vmatpush.msra.mxu0 %v117
    %135 = vmatpush.msra.mxu0 %v116
    %136 = vmatpush.msra.mxu0 %v115
    %137 = vmatpush.msra.mxu0 %v114
    %138 = vmatpush.msra.mxu0 %v113
    %139 = vmatpush.msra.mxu0 %v112
    %140 = vmatpush.msra.mxu0 %v111
    %141 = vmatpush.msra.mxu0 %v110
    %142 = vmatpush.msra.mxu0 %v109
    %143 = vmatpush.msra.mxu0 %v108
    %144 = vmatmul.f32.gmra.mxu0 %v107
    %v145 = vpop.f32.mrf.mxu0
    %v146 = vadd.f32 %v126, %v145
    %147 = vdwg.mxu0
    %148 = vst [vmem:[#allocation8] sm:$0xff] %v146
    // Predicated region
    $region34: #{tpu_custom_call.1} parent=1 // pred_check
      _
    $region35: #{tpu_custom_call.1} parent=1 // pred_check_branch
      %150 = sbr.rel (0) target = $region37
    $region36: #{tpu_custom_call.1} parent=1 // pred_region
      %152 = vsyncadd [#allocation4], 0
      %s154 = sshll.u32 [#allocation8], 4
      %s155 = int_to_ptr.vmem [resolvable:$true] %s154
      %s156 = sshll.u32 %s5, 4
      %s157 = int_to_ptr.hbm [resolvable:$true] %s156
      %159 = dma.vmem_to_hbm [thread:$0]  %s155, 128, %s157, [#allocation4]
    $region37: #{tpu_custom_call.1} parent=1 // pred_fallthru
      _
    // Predicated region
    $region38: #{tpu_custom_call.1} parent=1 // pred_check
      _
    $region39: #{tpu_custom_call.1} parent=1 // pred_check_branch
      %161 = sbr.rel (0) target = $region41
    $region40: #{tpu_custom_call.1} parent=1 // pred_region
      %163 = dma.done [#allocation4], 128
    $region41: #{tpu_custom_call.1} parent=1 // pred_fallthru
      _
    %164 = vsyncpa [#allocation3], 1
    %165 = vsyncpa [#allocation6], 1
    %166 = vsyncpa [#allocation4], 1

</llo_original>
